<compile_context>
chip_gen: v6e
topology: v6e:2x2x1
jax: 0.10.0
libtpu: 0.0.40
codegen_flags: <defaults>
</compile_context>

<pallas_src>
import functools

import jax
import jax.numpy as jnp
from jax.experimental import pallas as pl
from jax.experimental.pallas import tpu as pltpu


def _fused_kernel(x_ref, w_ref, b_ref, o_ref, *, m, f):
    """One MXU pass: r = x @ [Wc1 | Wc2] + [bc1 | bc2]  -> (m, 2f).

    The two lane-halves are stored into adjacent sublane blocks of the output
    (rows 0..m-1 and m..2m-1) so the host-side epilogue is a plain reshape.
    """
    r = jnp.dot(x_ref[...], w_ref[...],
                preferred_element_type=jnp.float32) + b_ref[...]
    o_ref[0:m, :] = r[:, 0:f]            # fold(linear3 . linear1)(x)
    o_ref[m:2 * m, :] = r[:, f:2 * f]    # fold(linear3 . linear2)(x + x)


def prepare_params(params):
    """Fold linear3 into linear1/linear2 and pack, computed ONCE and reused.

    cat((v1, v3), dim=1) followed by the row-wise linear3 is just linear3
    applied to each half independently, so:
        Wc1 = W1^T @ W3^T          bc1 = b1 @ W3^T + b3
        Wc2 = 2 * W2^T @ W3^T      bc2 = b2 @ W3^T + b3     (v2 = x + x = 2x)
    Packed side by side along lanes; contraction dim stays at F (no padding).
    """
    (w1, b1), (w2, b2), (w3, b3) = params
    wc1 = w1.T @ w3.T                     # (F, F)
    wc2 = 2.0 * (w2.T @ w3.T)             # (F, F)
    bc1 = b1 @ w3.T + b3                  # (F,)
    bc2 = b2 @ w3.T + b3                  # (F,)
    w_packed = jnp.concatenate([wc1, wc2], axis=1)      # (F, 2F)
    b_packed = jnp.concatenate([bc1, bc2])[None, :]     # (1, 2F)
    return (jnp.asarray(w_packed, jnp.float32),
            jnp.asarray(b_packed, jnp.float32))


@jax.jit
def model_forward(x, w_packed, b_packed):
    """x: (B, S, F) f32 -> (B, 2*S, F), matching Model.forward."""
    B, S, F = x.shape
    m = B * S
    x2d = x.reshape(m, F)   # no zero-padding: full-array BlockSpec handles it

    vmem = pl.BlockSpec(memory_space=pltpu.MemorySpace.VMEM)
    out = pl.pallas_call(
        functools.partial(_fused_kernel, m=m, f=F),
        out_shape=jax.ShapeDtypeStruct((2 * m, F), jnp.float32),
        # No grid: a single invocation with full arrays resident in VMEM, so
        # there is no pipeline / double-buffer overhead for this tiny shape.
        in_specs=[vmem, vmem, vmem],
        out_specs=vmem,
    )(x2d, w_packed, b_packed)

    if B == 1:
        # Rows are already [o1 ; o2] == cat((v1, v3), dim=1): plain reshape.
        return out.reshape(B, 2 * S, F)
    # General-B fallback (cat is per-batch along dim=1).
    h1 = out[:m].reshape(B, S, F)
    h2 = out[m:].reshape(B, S, F)
    return jnp.concatenate([h1, h2], axis=1)


def _reference(x, params):
    (w1, b1), (w2, b2), (w3, b3) = params
    v1 = x @ w1.T + b1
    v2 = x + x
    v3 = v2 @ w2.T + b2
    return jnp.concatenate([v1, v3], axis=1) @ w3.T + b3


if __name__ == "__main__":
    key = jax.random.PRNGKey(0)
    kx, k1, k2, k3, kb1, kb2, kb3 = jax.random.split(key, 7)

    # Input matching the module spec: x = torch.randn(1, 2, 2)
    x = jax.random.normal(kx, (1, 2, 2), dtype=jnp.float32)

    # Deterministic Linear(2, 2) parameters (torch convention: W is (out, in)).
    bound = 1.0 / (2.0 ** 0.5)
    w1 = jax.random.uniform(k1, (2, 2), jnp.float32, -bound, bound)
    w2 = jax.random.uniform(k2, (2, 2), jnp.float32, -bound, bound)
    w3 = jax.random.uniform(k3, (2, 2), jnp.float32, -bound, bound)
    b1 = jax.random.uniform(kb1, (2,), jnp.float32, -bound, bound)
    b2 = jax.random.uniform(kb2, (2,), jnp.float32, -bound, bound)
    b3 = jax.random.uniform(kb3, (2,), jnp.float32, -bound, bound)
    params = ((w1, b1), (w2, b2), (w3, b3))

    # Fold + pack the weights exactly once; reused across every forward call.
    w_packed, b_packed = jax.block_until_ready(prepare_params(params))

    out = jax.block_until_ready(model_forward(x, w_packed, b_packed))
    ref = _reference(x, params)

    assert out.shape == (1, 4, 2), out.shape
    assert jnp.allclose(out, ref, atol=1e-5, rtol=1e-5), (out, ref)
    print("KERNEL_OK")
</pallas_src>

<mosaic_0001>
module attributes {stable_mosaic.version = 11 : i64} {
  func.func @_fused_kernel(%arg0: memref<2x2xf32, #tpu.memory_space<vmem>>, %arg1: memref<2x4xf32, #tpu.memory_space<vmem>>, %arg2: memref<1x4xf32, #tpu.memory_space<vmem>>, %arg3: memref<4x2xf32, #tpu.memory_space<vmem>>) attributes {dimension_semantics = [], scalar_prefetch = 0 : i64, scratch_operands = 0 : i64, tpu.core_type = #tpu.core_type<tc>} {
    %c0 = arith.constant 0 : index
    %c0_0 = arith.constant 0 : index
    %0 = vector.load %arg0[%c0, %c0_0] : memref<2x2xf32, #tpu.memory_space<vmem>>, vector<2x2xf32>
    %c0_1 = arith.constant 0 : index
    %c0_2 = arith.constant 0 : index
    %1 = vector.load %arg1[%c0_1, %c0_2] : memref<2x4xf32, #tpu.memory_space<vmem>>, vector<2x4xf32>
    %cst = arith.constant dense<0.000000e+00> : vector<2x4xf32>
    %2 = tpu.matmul %0, %1, %cst {dimension_numbers = #tpu.dot_dimension_numbers<[1], [0], [0], [1], [0, 0, 1, 1], [], []>} : vector<2x2xf32>, vector<2x4xf32>, vector<2x4xf32> -> vector<2x4xf32>
    %c0_3 = arith.constant 0 : index
    %c0_4 = arith.constant 0 : index
    %3 = vector.load %arg2[%c0_3, %c0_4] : memref<1x4xf32, #tpu.memory_space<vmem>>, vector<1x4xf32>
    %4 = vector.broadcast %3 : vector<1x4xf32> to vector<2x4xf32>
    %5 = arith.addf %2, %4 : vector<2x4xf32>
    %6 = vector.extract_strided_slice %5 {offsets = [0, 0], sizes = [2, 2], strides = [1, 1]} : vector<2x4xf32> to vector<2x2xf32>
    %c0_5 = arith.constant 0 : index
    %c0_6 = arith.constant 0 : index
    %7 = vector.load %arg3[%c0_5, %c0_6] : memref<4x2xf32, #tpu.memory_space<vmem>>, vector<2x2xf32>
    tpu.vector_store %arg3[%c0_5, %c0_6], %6 {strides = array<i32>} : memref<4x2xf32, #tpu.memory_space<vmem>>, vector<2x2xf32>,
    %8 = vector.extract_strided_slice %5 {offsets = [0, 2], sizes = [2, 2], strides = [1, 1]} : vector<2x4xf32> to vector<2x2xf32>
    %c2 = arith.constant 2 : index
    %c0_7 = arith.constant 0 : index
    %9 = vector.load %arg3[%c2, %c0_7] : memref<4x2xf32, #tpu.memory_space<vmem>>, vector<2x2xf32>
    tpu.vector_store %arg3[%c2, %c0_7], %8 {strides = array<i32>} : memref<4x2xf32, #tpu.memory_space<vmem>>, vector<2x2xf32>,
    return
  }
}

</mosaic_0001>

<llo_original>
// kernel: model_forward.1
$region0: #{model_forward.1}
  #allocation0 [shape = 'u32[]', space=smem, size = 0x4, offset = 0x4, fixed_abs, tag = 'smem constant byte address 0x4 - core index']
  #allocation1 [shape = 'u32[144,128]{1,0:T(1,128)}', space=vmem, size = 0x12000, scoped, tag = 'internal scratch']
  %s0 = inlined_call_operand.hbm [shape: f32[2,2], index: 0, kind: input, shape index: {}]
  %s1 = inlined_call_operand.vmem [shape: f32[2,4], index: 1, kind: input, shape index: {}]
  %s2 = inlined_call_operand.vmem [shape: f32[1,4], index: 2, kind: input, shape index: {}]
  %s3 = inlined_call_operand.vmem [shape: f32[4,2], index: 3, kind: output, shape index: {}]
  %s4 = sld [smem:[#allocation0]]
  $region26: #{model_forward.1} parent=0
    _
  %s6 = ssub.s32 1, %s4
  %s7 = scalar_select 0, %s6, %s4
  $region1: #{model_forward.1} parent=0
    #allocation2 [shape = 'u8[1024]{0}', space=vmem, size = 0x400, scoped, tag = 'input window, operand 0, single buffered']
    #allocation3 [shape = 's32[1]{0}', space=sflag, size = 0x4, scoped, tag = 'scoped memory for model_forward.1']
    %8 = vsyncpa [#allocation3], 0
    // Predicated region
    $region2: #{model_forward.1} parent=1 // pred_check
      _
    $region3: #{model_forward.1} parent=1 // pred_check_branch
      %10 = sbr.rel (0) target = $region5
    $region4: #{model_forward.1} parent=1 // pred_region
      %s12 = ssub.s32 32, 32
      %13 = vsyncadd [#allocation3], %s12
      %s15 = sshll.u32 [#allocation2], 4
      %s16 = int_to_ptr.vmem [resolvable:$true] %s15
      %18 = dma.hbm_to_vmem [thread:$0]  %s0, 32, %s16, [#allocation3]
    $region5: #{model_forward.1} parent=1 // pred_fallthru
      _
    // Predicated region
    $region6: #{model_forward.1} parent=1 // pred_check
      _
    $region7: #{model_forward.1} parent=1 // pred_check_branch
      %20 = sbr.rel (0) target = $region9
    $region8: #{model_forward.1} parent=1 // pred_region
      _
    $region9: #{model_forward.1} parent=1 // pred_fallthru
      _
    // Predicated region
    $region10: #{model_forward.1} parent=1 // pred_check
      _
    $region11: #{model_forward.1} parent=1 // pred_check_branch
      %22 = sbr.rel (0) target = $region13
    $region12: #{model_forward.1} parent=1 // pred_region
      _
    $region13: #{model_forward.1} parent=1 // pred_fallthru
      _
    // Predicated region
    $region14: #{model_forward.1} parent=1 // pred_check
      _
    $region15: #{model_forward.1} parent=1 // pred_check_branch
      %24 = sbr.rel (0) target = $region17
    $region16: #{model_forward.1} parent=1 // pred_region
      %25 = dma.done [#allocation3], 32
    $region17: #{model_forward.1} parent=1 // pred_fallthru
      _
    %v26 = vld [vmem:[#allocation2] sm:$0x3]
    %v27 = vld [vmem:[%s1] sm:$0x3]
    %v28 = vld [vmem:[%s2] sm:$0x1]
    %v30 = vlaneseq
    %v31 = vshrl.u32 %v30, 7
    %v32 = vsub.s32 0, %v31
    %v33 = vrot.slane %v28, %v32
    %vm35 = vcmask 15360
    %v37 = vsel %vm35, %v26, 0
    %vm39 = vcmask 1041408
    %v41 = vsel %vm39, %v27, 0
    %43 = vmatprep.subr.mxu0 0.0
    %44 = vmatpush1.msra.mxu0 0.0
    %45 = vmatprep.subr.mxu0 0.0
    %46 = vmatpush1.msra.mxu0 0.0
    %47 = vmatprep.subr.mxu0 0.0
    %48 = vmatpush1.msra.mxu0 0.0
    %49 = vmatprep.subr.mxu0 0.0
    %50 = vmatpush1.msra.mxu0 0.0
    %51 = vmatprep.subr.mxu0 0.0
    %52 = vmatpush1.msra.mxu0 0.0
    %53 = vmatprep.subr.mxu0 0.0
    %54 = vmatpush1.msra.mxu0 0.0
    %55 = vmatprep.subr.mxu0 0.0
    %56 = vmatpush1.msra.mxu0 0.0
    %57 = vmatprep.subr.mxu0 0.0
    %58 = vmatpush1.msra.mxu0 0.0
    %59 = vmatprep.subr.mxu0 0.0
    %60 = vmatpush1.msra.mxu0 0.0
    %61 = vmatprep.subr.mxu0 0.0
    %62 = vmatpush1.msra.mxu0 0.0
    %63 = vmatprep.subr.mxu0 0.0
    %64 = vmatpush1.msra.mxu0 0.0
    %65 = vmatprep.subr.mxu0 0.0
    %66 = vmatpush1.msra.mxu0 0.0
    %67 = vmatprep.subr.mxu0 0.0
    %68 = vmatpush1.msra.mxu0 0.0
    %69 = vmatprep.subr.mxu0 0.0
    %70 = vmatpush1.msra.mxu0 0.0
    %71 = vmatprep.subr.mxu0 0.0
    %72 = vmatpush1.msra.mxu0 0.0
    %73 = vmatprep.subr.mxu0 0.0
    %74 = vmatpush1.msra.mxu0 %v41
    %75 = vmatprep.subr.mxu0 0.0
    %76 = vmatpush2.msra.mxu0 0.0
    %77 = vmatprep.subr.mxu0 0.0
    %78 = vmatpush2.msra.mxu0 0.0
    %79 = vmatprep.subr.mxu0 0.0
    %80 = vmatpush2.msra.mxu0 0.0
    %81 = vmatprep.subr.mxu0 0.0
    %82 = vmatpush2.msra.mxu0 0.0
    %83 = vmatprep.subr.mxu0 0.0
    %84 = vmatpush2.msra.mxu0 0.0
    %85 = vmatprep.subr.mxu0 0.0
    %86 = vmatpush2.msra.mxu0 0.0
    %87 = vmatprep.subr.mxu0 0.0
    %88 = vmatpush2.msra.mxu0 0.0
    %89 = vmatprep.subr.mxu0 0.0
    %90 = vmatpush2.msra.mxu0 0.0
    %91 = vmatprep.subr.mxu0 0.0
    %92 = vmatpush2.msra.mxu0 0.0
    %93 = vmatprep.subr.mxu0 0.0
    %94 = vmatpush2.msra.mxu0 0.0
    %95 = vmatprep.subr.mxu0 0.0
    %96 = vmatpush2.msra.mxu0 0.0
    %97 = vmatprep.subr.mxu0 0.0
    %98 = vmatpush2.msra.mxu0 0.0
    %99 = vmatprep.subr.mxu0 0.0
    %100 = vmatpush2.msra.mxu0 0.0
    %101 = vmatprep.subr.mxu0 0.0
    %102 = vmatpush2.msra.mxu0 0.0
    %103 = vmatprep.subr.mxu0 0.0
    %104 = vmatpush2.msra.mxu0 0.0
    %105 = vmatprep.subr.mxu0 0.0
    %106 = vmatpush2.msra.mxu0 0.0
    %107 = vmatprep.mubr.f32.mxu0 0.0
    %108 = vmatmul.mubr.f32.gmra.mxu0 %v37
    %v109 = vpop.f32.mrf.mxu0
    %v110 = vadd.f32 %v33, %v109
    %v111 = vpop.f32.mrf.mxu0
    %112 = vdwg.mxu0
    %vm113 = vcmask 9216
    %114 = vst.msk [vmem:[%s3] sm:$0x3] %vm113, %v110
    %116 = vrot.lane.b32.xlu0 %v110, 126
    %v117 = vpop.permute.xlu0 %116
    %119 = vst.msk [vmem:[%s3 + $0x2] sm:$0x3] %vm113, %v117
    // Predicated region
    $region18: #{model_forward.1} parent=1 // pred_check
      _
    $region19: #{model_forward.1} parent=1 // pred_check_branch
      %121 = sbr.rel (0) target = $region21
    $region20: #{model_forward.1} parent=1 // pred_region
      _
    $region21: #{model_forward.1} parent=1 // pred_fallthru
      _
    // Predicated region
    $region22: #{model_forward.1} parent=1 // pred_check
      _
    $region23: #{model_forward.1} parent=1 // pred_check_branch
      %123 = sbr.rel (0) target = $region25
    $region24: #{model_forward.1} parent=1 // pred_region
      _
    $region25: #{model_forward.1} parent=1 // pred_fallthru
      _
    %124 = vsyncpa [#allocation3], 1

</llo_original>
